<compile_context>
chip_gen: v7x
topology: tpu7x:2x2x1
jax: 0.10.0
libtpu: 0.0.40
codegen_flags: <defaults>
</compile_context>

<pallas_src>
import functools

import jax
import jax.numpy as jnp
from jax.experimental import pallas as pl
from jax.experimental.pallas import tpu as pltpu

C_HID = 100      # conv1 out_channels
C_PAD = 128      # hidden channels padded to a full lane group
K = 3            # conv1 kernel size
PAD = 2          # conv1 padding
KK_PAD = 16      # 9 taps + 1 bias row, padded to 16 sublanes


def _cdiv(a, b):
    return (a + b - 1) // b


def _round_up(a, b):
    return _cdiv(a, b) * b


def _fused_kernel(cur_ref, nxt_ref, w1_ref, w2_ref, o_ref, *, offsets, tm):
    # cur_ref : (1, TM)     flat padded-image window for this tile
    # nxt_ref : (1, TM)     next window (halo for right/bottom taps)
    # w1_ref  : (128, 16)   [conv1 taps | b1 | const-channel col | zeros]
    # w2_ref  : (1, 128)    [conv2 weights | b2 | zeros]
    # o_ref   : (1, TM)     sigmoid output tile (lane-dense store)
    win = jnp.concatenate([cur_ref[...], nxt_ref[...]], axis=1)        # (1, 2*TM)
    rows = [win[:, off:off + tm] for off in offsets]                   # 9 x (1, TM)
    rows.append(jnp.ones((1, tm), jnp.float32))                        # b1-fold row
    rows.append(jnp.zeros((KK_PAD - len(offsets) - 1, tm), jnp.float32))
    p = jnp.concatenate(rows, axis=0)                                  # (16, TM)
    h = jnp.dot(w1_ref[...], p, preferred_element_type=jnp.float32)    # (128, TM)
    h = jnp.maximum(h, 0.0)                                            # ReLU
    y = jnp.dot(w2_ref[...], h, preferred_element_type=jnp.float32)    # (1, TM)
    o_ref[...] = jax.nn.sigmoid(y)


@functools.partial(jax.jit, static_argnames=("tm",))
def grid_prediction_forward(x, w1, b1, w2, b2, tm=512):
    """x: (N, 1, H, W) float -> (N, 1, H, W) float32 (matches the PyTorch module)."""
    n, c, h, w = x.shape
    assert c == 1
    hp, wp = h + 2 * PAD, w + 2 * PAD            # zero-padded image dims
    # All tap offsets (up to 2*Wp + 2) must fit inside the current+next window.
    tm = max(tm, _round_up(2 * wp + 2, 128))
    m = n * hp * wp                              # one conv output per padded pixel
    g = _cdiv(m, tm)                             # grid steps (>= 2 for the demo shape)

    # Flattened zero-padded image, padded by one extra tile so block i+1 exists.
    xp = jnp.pad(x[:, 0].astype(jnp.float32), ((0, 0), (PAD, PAD), (PAD, PAD)))
    xflat = jnp.pad(xp.reshape(-1), (0, (g + 1) * tm - m)).reshape(1, -1)

    # conv1 as a (128, 16) matmul.  Columns 0..8: taps in (ky, kx) order.
    # Column 9 multiplies the constant-1 patch row -> folds b1.
    # Hidden channel 100 gets value 1 after ReLU -> folds b2 through w2.
    w1m = jnp.zeros((C_PAD, KK_PAD), jnp.float32)
    w1m = w1m.at[:C_HID, :K * K].set(w1.reshape(C_HID, K * K).astype(jnp.float32))
    w1m = w1m.at[:C_HID, K * K].set(b1.astype(jnp.float32))
    w1m = w1m.at[C_HID, K * K].set(1.0)
    w2m = jnp.zeros((1, C_PAD), jnp.float32)
    w2m = w2m.at[0, :C_HID].set(w2.reshape(C_HID).astype(jnp.float32))
    w2m = w2m.at[0, C_HID].set(b2.reshape(()).astype(jnp.float32))

    offsets = tuple(ky * wp + kx for ky in range(K) for kx in range(K))

    out_flat = pl.pallas_call(
        functools.partial(_fused_kernel, offsets=offsets, tm=tm),
        out_shape=jax.ShapeDtypeStruct((1, g * tm), jnp.float32),
        grid_spec=pltpu.PrefetchScalarGridSpec(
            num_scalar_prefetch=0,
            grid=(g,),
            in_specs=[
                pl.BlockSpec((1, tm), lambda i: (0, i)),        # current window
                pl.BlockSpec((1, tm), lambda i: (0, i + 1)),    # halo window
                pl.BlockSpec((C_PAD, KK_PAD), lambda i: (0, 0)),
                pl.BlockSpec((1, C_PAD), lambda i: (0, 0)),
            ],
            out_specs=pl.BlockSpec((1, tm), lambda i: (0, i)),
        ),
        compiler_params=pltpu.CompilerParams(
            dimension_semantics=("parallel",)),
    )(xflat, xflat, w1m, w2m)

    # Conv outputs live on the padded (Hp, Wp) grid.  The PyTorch crop [1:-1]
    # of the (H+2, W+2) conv output corresponds to rows/cols [1, H+1) x [1, W+1).
    grid_out = out_flat[0, :m].reshape(n, hp, wp)
    return grid_out[:, 1:1 + h, 1:1 + w][:, None, :, :]


def _reference_forward(x, w1, b1, w2, b2):
    """Pure-JAX reference (matches the PyTorch module)."""
    y = jax.lax.conv_general_dilated(
        x.astype(jnp.float32), w1.astype(jnp.float32), window_strides=(1, 1),
        padding=((PAD, PAD), (PAD, PAD)),
        dimension_numbers=("NCHW", "OIHW", "NCHW"))
    y = y + b1.reshape(1, C_HID, 1, 1)
    y = jnp.maximum(y, 0.0)
    y = jax.lax.conv_general_dilated(
        y, w2.astype(jnp.float32), window_strides=(1, 1), padding="VALID",
        dimension_numbers=("NCHW", "OIHW", "NCHW"))
    y = y + b2.reshape(1, 1, 1, 1)
    y = jax.nn.sigmoid(y)
    return y[:, :, 1:-1, 1:-1]


if __name__ == "__main__":
    key = jax.random.PRNGKey(0)
    kx, k1, kb1, k2, kb2 = jax.random.split(key, 5)

    # Deterministic synthetic parameters (PyTorch shapes: OIHW weights).
    w1 = 0.1 * jax.random.normal(k1, (C_HID, 1, K, K), dtype=jnp.float32)
    b1 = 0.1 * jax.random.normal(kb1, (C_HID,), dtype=jnp.float32)
    w2 = 0.1 * jax.random.normal(k2, (1, C_HID, 1, 1), dtype=jnp.float32)
    b2 = 0.1 * jax.random.normal(kb2, (1,), dtype=jnp.float32)

    ok = True
    for (N, H, W) in [(2, 16, 16), (1, 8, 8)]:
        kx, sub = jax.random.split(kx)
        x = jax.random.normal(sub, (N, 1, H, W), dtype=jnp.float32)
        out = jax.block_until_ready(grid_prediction_forward(x, w1, b1, w2, b2))
        ref = _reference_forward(x, w1, b1, w2, b2)
        assert out.shape == (N, 1, H, W), out.shape
        err = float(jnp.max(jnp.abs(out - ref)))
        assert jnp.allclose(out, ref, atol=1e-4, rtol=1e-4), err
        ok = ok and True

    if ok:
        print("KERNEL_OK")
</pallas_src>

<mosaic_0001>
module attributes {stable_mosaic.version = 11 : i64} {
  func.func @_fused_kernel(%arg0: i32, %arg1: memref<1x512xf32, #tpu.memory_space<vmem>>, %arg2: memref<1x512xf32, #tpu.memory_space<vmem>>, %arg3: memref<128x16xf32, #tpu.memory_space<vmem>>, %arg4: memref<1x128xf32, #tpu.memory_space<vmem>>, %arg5: memref<1x512xf32, #tpu.memory_space<vmem>>) attributes {dimension_semantics = [#tpu.dimension_semantics<parallel>], iteration_bounds = array<i64: 2>, scalar_prefetch = 0 : i64, scratch_operands = 0 : i64, tpu.core_type = #tpu.core_type<tc>, window_params = [{transform_indices = @transform_0, window_bounds = array<i64: 1, 512>}, {transform_indices = @transform_1, window_bounds = array<i64: 1, 512>}, {pipeline_mode = #tpu.pipeline_mode<synchronous>, transform_indices = @transform_2, window_bounds = array<i64: 128, 16>}, {pipeline_mode = #tpu.pipeline_mode<synchronous>, transform_indices = @transform_3, window_bounds = array<i64: 1, 128>}, {transform_indices = @transform_4, window_bounds = array<i64: 1, 512>}]} {
    %c0 = arith.constant 0 : index
    %c0_0 = arith.constant 0 : index
    %0 = vector.load %arg1[%c0, %c0_0] : memref<1x512xf32, #tpu.memory_space<vmem>>, vector<1x512xf32>
    %c0_1 = arith.constant 0 : index
    %c0_2 = arith.constant 0 : index
    %1 = vector.load %arg2[%c0_1, %c0_2] : memref<1x512xf32, #tpu.memory_space<vmem>>, vector<1x512xf32>
    %2 = tpu.concatenate %0, %1 in 1 : vector<1x512xf32>, vector<1x512xf32> -> vector<1x1024xf32>
    %3 = vector.extract_strided_slice %2 {offsets = [0, 0], sizes = [1, 512], strides = [1, 1]} : vector<1x1024xf32> to vector<1x512xf32>
    %4 = vector.extract_strided_slice %2 {offsets = [0, 1], sizes = [1, 512], strides = [1, 1]} : vector<1x1024xf32> to vector<1x512xf32>
    %5 = vector.extract_strided_slice %2 {offsets = [0, 2], sizes = [1, 512], strides = [1, 1]} : vector<1x1024xf32> to vector<1x512xf32>
    %6 = vector.extract_strided_slice %2 {offsets = [0, 20], sizes = [1, 512], strides = [1, 1]} : vector<1x1024xf32> to vector<1x512xf32>
    %7 = vector.extract_strided_slice %2 {offsets = [0, 21], sizes = [1, 512], strides = [1, 1]} : vector<1x1024xf32> to vector<1x512xf32>
    %8 = vector.extract_strided_slice %2 {offsets = [0, 22], sizes = [1, 512], strides = [1, 1]} : vector<1x1024xf32> to vector<1x512xf32>
    %9 = vector.extract_strided_slice %2 {offsets = [0, 40], sizes = [1, 512], strides = [1, 1]} : vector<1x1024xf32> to vector<1x512xf32>
    %10 = vector.extract_strided_slice %2 {offsets = [0, 41], sizes = [1, 512], strides = [1, 1]} : vector<1x1024xf32> to vector<1x512xf32>
    %11 = vector.extract_strided_slice %2 {offsets = [0, 42], sizes = [1, 512], strides = [1, 1]} : vector<1x1024xf32> to vector<1x512xf32>
    %cst = arith.constant 1.000000e+00 : f32
    %12 = vector.broadcast %cst : f32 to vector<1x512xf32>
    %cst_3 = arith.constant 0.000000e+00 : f32
    %13 = vector.broadcast %cst_3 : f32 to vector<6x512xf32>
    %14 = tpu.concatenate %3, %4, %5, %6, %7, %8, %9, %10, %11, %12, %13 in 0 : vector<1x512xf32>, vector<1x512xf32>, vector<1x512xf32>, vector<1x512xf32>, vector<1x512xf32>, vector<1x512xf32>, vector<1x512xf32>, vector<1x512xf32>, vector<1x512xf32>, vector<1x512xf32>, vector<6x512xf32> -> vector<16x512xf32>
    %c0_4 = arith.constant 0 : index
    %c0_5 = arith.constant 0 : index
    %15 = vector.load %arg3[%c0_4, %c0_5] : memref<128x16xf32, #tpu.memory_space<vmem>>, vector<128x16xf32>
    %cst_6 = arith.constant dense<0.000000e+00> : vector<128x512xf32>
    %16 = tpu.matmul %15, %14, %cst_6 {dimension_numbers = #tpu.dot_dimension_numbers<[1], [0], [0], [1], [0, 0, 1, 1], [], []>} : vector<128x16xf32>, vector<16x512xf32>, vector<128x512xf32> -> vector<128x512xf32>
    %cst_7 = arith.constant 0.000000e+00 : f32
    %17 = vector.broadcast %cst_7 : f32 to vector<128x512xf32>
    %18 = arith.maximumf %16, %17 : vector<128x512xf32>
    %c0_8 = arith.constant 0 : index
    %c0_9 = arith.constant 0 : index
    %19 = vector.load %arg4[%c0_8, %c0_9] : memref<1x128xf32, #tpu.memory_space<vmem>>, vector<1x128xf32>
    %cst_10 = arith.constant dense<0.000000e+00> : vector<1x512xf32>
    %20 = tpu.matmul %19, %18, %cst_10 {dimension_numbers = #tpu.dot_dimension_numbers<[1], [0], [0], [1], [0, 0, 1, 1], [], []>} : vector<1x128xf32>, vector<128x512xf32>, vector<1x512xf32> -> vector<1x512xf32>
    %21 = arith.negf %20 : vector<1x512xf32>
    %22 = math.exp %21 : vector<1x512xf32>
    %cst_11 = arith.constant 1.000000e+00 : f32
    %23 = vector.broadcast %cst_11 : f32 to vector<1x512xf32>
    %24 = arith.addf %23, %22 : vector<1x512xf32>
    %25 = arith.divf %23, %24 : vector<1x512xf32>
    %c0_12 = arith.constant 0 : index
    %c0_13 = arith.constant 0 : index
    %26 = vector.load %arg5[%c0_12, %c0_13] : memref<1x512xf32, #tpu.memory_space<vmem>>, vector<1x512xf32>
    tpu.vector_store %arg5[%c0_12, %c0_13], %25 {strides = array<i32>} : memref<1x512xf32, #tpu.memory_space<vmem>>, vector<1x512xf32>,
    return
  }
  func.func @transform_0(%arg0: i32) -> (i32, i32) {
    %c0_i32 = arith.constant 0 : i32
    %c0_i32_0 = arith.constant 0 : i32
    return %c0_i32, %arg0 : i32, i32
  }
  func.func @transform_1(%arg0: i32) -> (i32, i32) {
    %c1_i32 = arith.constant 1 : i32
    %0 = arith.addi %arg0, %c1_i32 : i32
    %c0_i32 = arith.constant 0 : i32
    %c0_i32_0 = arith.constant 0 : i32
    return %c0_i32, %0 : i32, i32
  }
  func.func @transform_2(%arg0: i32) -> (i32, i32) {
    %c0_i32 = arith.constant 0 : i32
    %c0_i32_0 = arith.constant 0 : i32
    %c0_i32_1 = arith.constant 0 : i32
    return %c0_i32, %c0_i32_0 : i32, i32
  }
  func.func @transform_3(%arg0: i32) -> (i32, i32) {
    %c0_i32 = arith.constant 0 : i32
    %c0_i32_0 = arith.constant 0 : i32
    %c0_i32_1 = arith.constant 0 : i32
    return %c0_i32, %c0_i32_0 : i32, i32
  }
  func.func @transform_4(%arg0: i32) -> (i32, i32) {
    %c0_i32 = arith.constant 0 : i32
    %c0_i32_0 = arith.constant 0 : i32
    return %c0_i32, %arg0 : i32, i32
  }
}

</mosaic_0001>

<llo_original>
// kernel: squeeze.3
$region0: #{squeeze.3}
  %s0 = inlined_call_operand.vmem [shape: f32[800], index: 0, kind: input, shape index: {}]
  %s1 = inlined_call_operand.vmem [shape: f32[2,20,20], index: 1, kind: output, shape index: {}]
  %s2 = smov 3
  %v3 = vld [vmem:[%s0] ss:$5 sm:%s2]
  %vm4 = vcmask 162816
  %5 = vst.msk [vmem:[%s1] ss:$36 sm:$0x3] %vm4, %v3
  %s6 = scalar_lea.vmem %s0, 2
  %v7 = vld [vmem:[%s6] sm:$0x1]
  %8 = vrot.lane.b32.xlu0 %v7, 124
  %v9 = vpop.permute.xlu0 %8
  %vm10 = vcmask 162816
  %s11 = scalar_lea.vmem %s1, 13
  %12 = vst.msk [vmem:[%s11] sm:$0x1] %vm10, %v9
  %s13 = scalar_lea.vmem %s0, 4
  %v14 = vld [vmem:[%s13] sm:$0x1]
  %15 = vrot.lane.b32.xlu0 %v14, 120
  %v16 = vpop.permute.xlu0 %15
  %vm17 = vcmask 162816
  %s18 = scalar_lea.vmem %s1, 30
  %19 = vst.msk [vmem:[%s18] sm:$0x1] %vm17, %v16
  %s20 = scalar_lea.vmem %s0, 1
  %s21 = smov 3
  %v22 = vld [vmem:[%s20] ss:$5 sm:%s21]
  %23 = vrot.lane.b32.xlu0 %v22, 116
  %v24 = vpop.permute.xlu0 %23
  %vm25 = vcmask 162816
  %s26 = scalar_lea.vmem %s1, 7
  %27 = vst.msk [vmem:[%s26] ss:$36 sm:$0x3] %vm25, %v24
  %s28 = scalar_lea.vmem %s0, 3
  %v29 = vld [vmem:[%s28] sm:$0x1]
  %30 = vrot.lane.b32.xlu0 %v29, 112
  %v31 = vpop.permute.xlu0 %30
  %vm32 = vcmask 162816
  %s33 = scalar_lea.vmem %s1, 24
  %34 = vst.msk [vmem:[%s33] sm:$0x1] %vm32, %v31
  %s35 = smov 3
  %v36 = vld [vmem:[%s0] ss:$5 sm:%s35]
  %37 = vrot.lane.b32.xlu0 %v36, 108
  %v38 = vpop.permute.xlu0 %37
  %vm39 = vcmask 162816
  %s40 = scalar_lea.vmem %s1, 1
  %41 = vst.msk [vmem:[%s40] ss:$36 sm:$0x3] %vm39, %v38
  %s42 = scalar_lea.vmem %s0, 2
  %v43 = vld [vmem:[%s42] sm:$0x1]
  %44 = vrot.lane.b32.xlu0 %v43, 104
  %v45 = vpop.permute.xlu0 %44
  %vm46 = vcmask 162816
  %s47 = scalar_lea.vmem %s1, 14
  %48 = vst.msk [vmem:[%s47] sm:$0x1] %vm46, %v45
  %s49 = scalar_lea.vmem %s0, 4
  %v50 = vld [vmem:[%s49] sm:$0x1]
  %51 = vrot.lane.b32.xlu0 %v50, 100
  %v52 = vpop.permute.xlu0 %51
  %vm53 = vcmask 162816
  %s54 = scalar_lea.vmem %s1, 31
  %55 = vst.msk [vmem:[%s54] sm:$0x1] %vm53, %v52
  %s56 = scalar_lea.vmem %s0, 1
  %v57 = vld [vmem:[%s56] sm:$0x1]
  %58 = vrot.lane.b32.xlu0 %v57, 96
  %v59 = vpop.permute.xlu0 %58
  %vm60 = vcmask 162816
  %s61 = scalar_lea.vmem %s1, 8
  %62 = vst.msk [vmem:[%s61] sm:$0x1] %vm60, %v59
  %s63 = scalar_lea.vmem %s0, 3
  %v64 = vld [vmem:[%s63] sm:$0x1]
  %65 = vrot.lane.b32.xlu0 %v64, 92
  %v66 = vpop.permute.xlu0 %65
  %vm67 = vcmask 162816
  %s68 = scalar_lea.vmem %s1, 25
  %69 = vst.msk [vmem:[%s68] sm:$0x1] %vm67, %v66
  %s70 = smov 3
  %v71 = vld [vmem:[%s0] ss:$5 sm:%s70]
  %72 = vrot.lane.b32.xlu0 %v71, 88
  %v73 = vpop.permute.xlu0 %72
  %vm74 = vcmask 162816
  %s75 = scalar_lea.vmem %s1, 2
  %76 = vst.msk [vmem:[%s75] ss:$36 sm:$0x3] %vm74, %v73
  %s77 = scalar_lea.vmem %s0, 2
  %v78 = vld [vmem:[%s77] sm:$0x1]
  %79 = vrot.lane.b32.xlu0 %v78, 84
  %v80 = vpop.permute.xlu0 %79
  %vm81 = vcmask 162816
  %s82 = scalar_lea.vmem %s1, 15
  %83 = vst.msk [vmem:[%s82] sm:$0x1] %vm81, %v80
  %s84 = scalar_lea.vmem %s0, 4
  %v85 = vld [vmem:[%s84] sm:$0x1]
  %86 = vrot.lane.b32.xlu0 %v85, 80
  %v87 = vpop.permute.xlu0 %86
  %vm88 = vcmask 162816
  %s89 = scalar_lea.vmem %s1, 32
  %90 = vst.msk [vmem:[%s89] sm:$0x1] %vm88, %v87
  %s91 = scalar_lea.vmem %s0, 1
  %v92 = vld [vmem:[%s91] sm:$0x1]
  %93 = vrot.lane.b32.xlu0 %v92, 76
  %v94 = vpop.permute.xlu0 %93
  %vm95 = vcmask 162816
  %s96 = scalar_lea.vmem %s1, 9
  %97 = vst.msk [vmem:[%s96] sm:$0x1] %vm95, %v94
  %s98 = scalar_lea.vmem %s0, 3
  %v99 = vld [vmem:[%s98] sm:$0x1]
  %100 = vrot.lane.b32.xlu0 %v99, 72
  %v101 = vpop.permute.xlu0 %100
  %vm102 = vcmask 162816
  %s103 = scalar_lea.vmem %s1, 26
  %104 = vst.msk [vmem:[%s103] sm:$0x1] %vm102, %v101
  %s105 = smov 3
  %v106 = vld [vmem:[%s0] ss:$5 sm:%s105]
  %107 = vrot.lane.b32.xlu0 %v106, 68
  %v108 = vpop.permute.xlu0 %107
  %vm109 = vcmask 162816
  %s110 = scalar_lea.vmem %s1, 3
  %111 = vst.msk [vmem:[%s110] ss:$36 sm:$0x3] %vm109, %v108
  %s112 = scalar_lea.vmem %s0, 2
  %v113 = vld [vmem:[%s112] sm:$0x1]
  %114 = vrot.lane.b32.xlu0 %v113, 64
  %v115 = vpop.permute.xlu0 %114
  %vm116 = vcmask 162816
  %s117 = scalar_lea.vmem %s1, 16
  %118 = vst.msk [vmem:[%s117] sm:$0x1] %vm116, %v115
  %s119 = scalar_lea.vmem %s0, 4
  %v120 = vld [vmem:[%s119] sm:$0x1]
  %121 = vrot.lane.b32.xlu0 %v120, 60
  %v122 = vpop.permute.xlu0 %121
  %vm123 = vcmask 162816
  %s124 = scalar_lea.vmem %s1, 33
  %125 = vst.msk [vmem:[%s124] sm:$0x1] %vm123, %v122
  %s126 = scalar_lea.vmem %s0, 1
  %v127 = vld [vmem:[%s126] sm:$0x1]
  %128 = vrot.lane.b32.xlu0 %v127, 56
  %v129 = vpop.permute.xlu0 %128
  %vm130 = vcmask 162816
  %s131 = scalar_lea.vmem %s1, 10
  %132 = vst.msk [vmem:[%s131] sm:$0x1] %vm130, %v129
  %s133 = scalar_lea.vmem %s0, 3
  %v134 = vld [vmem:[%s133] sm:$0x1]
  %135 = vrot.lane.b32.xlu0 %v134, 52
  %v136 = vpop.permute.xlu0 %135
  %vm137 = vcmask 162816
  %s138 = scalar_lea.vmem %s1, 27
  %139 = vst.msk [vmem:[%s138] sm:$0x1] %vm137, %v136
  %s140 = smov 3
  %v141 = vld [vmem:[%s0] ss:$5 sm:%s140]
  %142 = vrot.lane.b32.xlu0 %v141, 48
  %v143 = vpop.permute.xlu0 %142
  %vm144 = vcmask 162816
  %s145 = scalar_lea.vmem %s1, 4
  %146 = vst.msk [vmem:[%s145] ss:$36 sm:$0x3] %vm144, %v143
  %s147 = scalar_lea.vmem %s0, 2
  %v148 = vld [vmem:[%s147] sm:$0x1]
  %149 = vrot.lane.b32.xlu0 %v148, 44
  %v150 = vpop.permute.xlu0 %149
  %vm151 = vcmask 162816
  %s152 = scalar_lea.vmem %s1, 17
  %153 = vst.msk [vmem:[%s152] sm:$0x1] %vm151, %v150
  %s154 = scalar_lea.vmem %s0, 4
  %v155 = vld [vmem:[%s154] sm:$0x1]
  %156 = vrot.lane.b32.xlu0 %v155, 40
  %v157 = vpop.permute.xlu0 %156
  %vm158 = vcmask 162816
  %s159 = scalar_lea.vmem %s1, 34
  %160 = vst.msk [vmem:[%s159] sm:$0x1] %vm158, %v157
  %s161 = scalar_lea.vmem %s0, 1
  %v162 = vld [vmem:[%s161] sm:$0x1]
  %163 = vrot.lane.b32.xlu0 %v162, 36
  %v164 = vpop.permute.xlu0 %163
  %vm165 = vcmask 162816
  %s166 = scalar_lea.vmem %s1, 11
  %167 = vst.msk [vmem:[%s166] sm:$0x1] %vm165, %v164
  %s168 = scalar_lea.vmem %s0, 3
  %v169 = vld [vmem:[%s168] sm:$0x1]
  %170 = vrot.lane.b32.xlu0 %v169, 32
  %v171 = vpop.permute.xlu0 %170
  %vm172 = vcmask 162816
  %s173 = scalar_lea.vmem %s1, 28
  %174 = vst.msk [vmem:[%s173] sm:$0x1] %vm172, %v171
  %s175 = smov 3
  %v176 = vld [vmem:[%s0] ss:$5 sm:%s175]
  %177 = vrot.lane.b32.xlu0 %v176, 28
  %v178 = vpop.permute.xlu0 %177
  %vm179 = vcmask 162816
  %s180 = scalar_lea.vmem %s1, 5
  %181 = vst.msk [vmem:[%s180] ss:$36 sm:$0x3] %vm179, %v178
  %s182 = scalar_lea.vmem %s0, 2
  %v183 = vld [vmem:[%s182] sm:$0x1]
  %184 = vrot.lane.b32.xlu0 %v183, 24
  %v185 = vpop.permute.xlu0 %184
  %vm186 = vcmask 162816
  %s187 = scalar_lea.vmem %s1, 18
  %188 = vst.msk [vmem:[%s187] sm:$0x1] %vm186, %v185
  %s189 = scalar_lea.vmem %s0, 4
  %v190 = vld [vmem:[%s189] sm:$0x1]
  %191 = vrot.lane.b32.xlu0 %v190, 20
  %v192 = vpop.permute.xlu0 %191
  %vm193 = vcmask 162816
  %s194 = scalar_lea.vmem %s1, 35
  %195 = vst.msk [vmem:[%s194] sm:$0x1] %vm193, %v192
  %s196 = scalar_lea.vmem %s0, 1
  %v197 = vld [vmem:[%s196] sm:$0x1]
  %s198 = scalar_lea.vmem %s0, 2
  %v199 = vld [vmem:[%s198] sm:$0x1]
  %vm200 = vcmask 916480
  %v201 = vsel %vm200, %v199, %v197
  %202 = vrot.lane.b32.xlu0 %v201, 16
  %v203 = vpop.permute.xlu0 %202
  %vm204 = vcmask 130048
  %s205 = scalar_lea.vmem %s1, 12
  %206 = vst.msk [vmem:[%s205] sm:$0x1] %vm204, %v203
  %vm207 = vcmask 162944
  %s208 = scalar_lea.vmem %s1, 12
  %209 = vst.msk [vmem:[%s208] sm:$0x1] %vm207, %v203
  %s210 = scalar_lea.vmem %s0, 3
  %v211 = vld [vmem:[%s210] sm:$0x1]
  %s212 = scalar_lea.vmem %s0, 4
  %v213 = vld [vmem:[%s212] sm:$0x1]
  %vm214 = vcmask 949248
  %v215 = vsel %vm214, %v213, %v211
  %216 = vrot.lane.b32.xlu0 %v215, 12
  %v217 = vpop.permute.xlu0 %216
  %vm218 = vcmask 97280
  %s219 = scalar_lea.vmem %s1, 29
  %220 = vst.msk [vmem:[%s219] sm:$0x1] %vm218, %v217
  %vm221 = vcmask 162912
  %s222 = scalar_lea.vmem %s1, 29
  %223 = vst.msk [vmem:[%s222] sm:$0x1] %vm221, %v217
  %s224 = smov 3
  %v225 = vld [vmem:[%s0] ss:$5 sm:%s224]
  %s226 = scalar_lea.vmem %s0, 1
  %s227 = smov 3
  %v228 = vld [vmem:[%s226] ss:$5 sm:%s227]
  %vm229 = vcmask 982016
  %v230 = vsel %vm229, %v228, %v225
  %231 = vrot.lane.b32.xlu0 %v230, 8
  %v232 = vpop.permute.xlu0 %231
  %vm233 = vcmask 64512
  %s234 = scalar_lea.vmem %s1, 6
  %235 = vst.msk [vmem:[%s234] ss:$36 sm:$0x3] %vm233, %v232
  %vm236 = vcmask 162880
  %s237 = scalar_lea.vmem %s1, 6
  %238 = vst.msk [vmem:[%s237] ss:$36 sm:$0x3] %vm236, %v232
  %s239 = scalar_lea.vmem %s0, 2
  %v240 = vld [vmem:[%s239] sm:$0x1]
  %s241 = scalar_lea.vmem %s0, 3
  %v242 = vld [vmem:[%s241] sm:$0x1]
  %vm243 = vcmask 1014784
  %v244 = vsel %vm243, %v242, %v240
  %245 = vrot.lane.b32.xlu0 %v244, 4
  %v246 = vpop.permute.xlu0 %245
  %vm247 = vcmask 31744
  %s248 = scalar_lea.vmem %s1, 19
  %249 = vst.msk [vmem:[%s248] sm:$0x1] %vm247, %v246
  %vm250 = vcmask 162848
  %s251 = scalar_lea.vmem %s1, 19
  %252 = vst.msk [vmem:[%s251] sm:$0x1] %vm250, %v246

// kernel: grid_prediction_forward.1
$region0: #{grid_prediction_forward.1}
  #allocation0 [shape = 'u32[]', space=smem, size = 0x4, offset = 0x4, fixed_abs, tag = 'smem constant byte address 0x4 - core index']
  #allocation1 [shape = 'u32[144,128]{1,0:T(1,128)}', space=vmem, size = 0x12000, scoped, tag = 'internal scratch']
  %s0 = inlined_call_operand.vmem [shape: f32[1,1536], index: 0, kind: input, shape index: {}, may-alias: {0,1}]
  %s1 = inlined_call_operand.vmem [shape: f32[1,1536], index: 1, kind: input, shape index: {}, may-alias: {0,1}]
  %s2 = inlined_call_operand.vmem [shape: f32[128,16], index: 2, kind: input, shape index: {}]
  %s3 = inlined_call_operand.vmem [shape: f32[1,128], index: 3, kind: input, shape index: {}]
  %s4 = inlined_call_operand.vmem [shape: f32[1,1024], index: 4, kind: output, shape index: {}]
  %s5 = sld [smem:[#allocation0]]
  $region49: #{grid_prediction_forward.1} parent=0
    _
  %s7 = ssub.s32 1, %s5
  %s8 = scalar_select 0, %s7, %s5
  loop: start=0, step=1, limit=4
  $region2: #{grid_prediction_forward.1} parent=0 // loop_pre_header
    _
  $region3: #{grid_prediction_forward.1} parent=0 // loop_header
    %s10 = sphi 0, %s14
    %p11 = scmp.ge.s32.totalorder %s10, 4
    %s20 = sphi 0, %s22
    %s23 = sphi 0, %s20
    %s24 = sphi 0, %s23
    %s40 = sphi 0, %s24
    %s48 = sphi 0, %s50
    %s51 = sphi 0, %s48
    %s52 = sphi 0, %s51
    %s68 = sphi 0, %s52
    %s72 = sphi 0, %s72
    %s74 = sphi 0, %s72
    %s75 = sphi 0, %s74
    %s89 = sphi 0, %s75
    %s93 = sphi 0, %s93
    %s95 = sphi 0, %s93
    %s96 = sphi 0, %s95
    %s110 = sphi 0, %s96
    %s116 = sphi 0, %s118
    %s119 = sphi 0, %s116
    %s120 = sphi 0, %s119
    %s136 = sphi 0, %s120
  $region4: #{grid_prediction_forward.1} parent=0 // loop_header_branch
    %13 = sbr.rel (%p11) target = $region8
  $region5: #{grid_prediction_forward.1} parent=0 // loop_body
    %s15 = ssub.s32 %s10, 1
    %s16 = ssub.s32 %s10, 2
    %s17 = sadd.s32 %s10, 1
    %s18 = ssub.s32 %s10, %s17
    %p19 = scmp.eq.s32.totalorder %s18, 0
    %s21 = sadd.s32 %s20, 1
    %s22 = scalar_select %p19, %s20, %s21
    %p25 = pneg %p19
    %p26 = scmp.eq.s32.totalorder %s10, 1
    %p27 = por %p25, %p26
    %p28 = scmp.ne.s32.totalorder %s20, %s23
    %p29 = scmp.eq.s32.totalorder %s10, 0
    %p30 = por %p28, %p29
    %p31 = scmp.ne.s32.totalorder %s20, %s23
    %p32 = scmp.eq.s32.totalorder %s15, 1
    %p33 = por %p31, %p32
    %p34 = scmp.ne.s32.totalorder %s23, %s24
    %p35 = scmp.eq.s32.totalorder %s15, 0
    %p36 = por %p34, %p35
    %p37 = scmp.ne.s32.totalorder %s23, %s24
    %p38 = scmp.eq.s32.totalorder %s16, 1
    %p39 = por %p37, %p38
    %p41 = scmp.ne.s32.totalorder %s24, %s40
    %p42 = scmp.eq.s32.totalorder %s16, 0
    %p43 = por %p41, %p42
    %s44 = sadd.s32 %s10, 1
    %s45 = sadd.s32 %s17, 1
    %s46 = ssub.s32 %s44, %s45
    %p47 = scmp.eq.s32.totalorder %s46, 0
    %s49 = sadd.s32 %s48, 1
    %s50 = scalar_select %p47, %s48, %s49
    %p53 = pneg %p47
    %p54 = scmp.eq.s32.totalorder %s10, 1
    %p55 = por %p53, %p54
    %p56 = scmp.ne.s32.totalorder %s48, %s51
    %p57 = scmp.eq.s32.totalorder %s10, 0
    %p58 = por %p56, %p57
    %p59 = scmp.ne.s32.totalorder %s48, %s51
    %p60 = scmp.eq.s32.totalorder %s15, 1
    %p61 = por %p59, %p60
    %p62 = scmp.ne.s32.totalorder %s51, %s52
    %p63 = scmp.eq.s32.totalorder %s15, 0
    %p64 = por %p62, %p63
    %p65 = scmp.ne.s32.totalorder %s51, %s52
    %p66 = scmp.eq.s32.totalorder %s16, 1
    %p67 = por %p65, %p66
    %p69 = scmp.ne.s32.totalorder %s52, %s68
    %p70 = scmp.eq.s32.totalorder %s16, 0
    %p71 = por %p69, %p70
    %s73 = sadd.s32 %s72, 1
    %p76 = scmp.eq.s32.totalorder %s10, 1
    %p77 = scmp.ne.s32.totalorder %s72, %s74
    %p78 = scmp.eq.s32.totalorder %s10, 0
    %p79 = por %p77, %p78
    %p80 = scmp.ne.s32.totalorder %s72, %s74
    %p81 = scmp.eq.s32.totalorder %s15, 1
    %p82 = por %p80, %p81
    %p83 = scmp.ne.s32.totalorder %s74, %s75
    %p84 = scmp.eq.s32.totalorder %s15, 0
    %p85 = por %p83, %p84
    %p86 = scmp.ne.s32.totalorder %s74, %s75
    %p87 = scmp.eq.s32.totalorder %s16, 1
    %p88 = por %p86, %p87
    %p90 = scmp.ne.s32.totalorder %s75, %s89
    %p91 = scmp.eq.s32.totalorder %s16, 0
    %p92 = por %p90, %p91
    %s94 = sadd.s32 %s93, 1
    %p97 = scmp.eq.s32.totalorder %s10, 1
    %p98 = scmp.ne.s32.totalorder %s93, %s95
    %p99 = scmp.eq.s32.totalorder %s10, 0
    %p100 = por %p98, %p99
    %p101 = scmp.ne.s32.totalorder %s93, %s95
    %p102 = scmp.eq.s32.totalorder %s15, 1
    %p103 = por %p101, %p102
    %p104 = scmp.ne.s32.totalorder %s95, %s96
    %p105 = scmp.eq.s32.totalorder %s15, 0
    %p106 = por %p104, %p105
    %p107 = scmp.ne.s32.totalorder %s95, %s96
    %p108 = scmp.eq.s32.totalorder %s16, 1
    %p109 = por %p107, %p108
    %p111 = scmp.ne.s32.totalorder %s96, %s110
    %p112 = scmp.eq.s32.totalorder %s16, 0
    %p113 = por %p111, %p112
    %s114 = ssub.s32 %s10, %s17
    %p115 = scmp.eq.s32.totalorder %s114, 0
    %s117 = sadd.s32 %s116, 1
    %s118 = scalar_select %p115, %s116, %s117
    %p121 = pneg %p115
    %p122 = scmp.eq.s32.totalorder %s10, 1
    %p123 = por %p121, %p122
    %p124 = scmp.ne.s32.totalorder %s116, %s119
    %p125 = scmp.eq.s32.totalorder %s10, 0
    %p126 = por %p124, %p125
    %p127 = scmp.ne.s32.totalorder %s116, %s119
    %p128 = scmp.eq.s32.totalorder %s15, 1
    %p129 = por %p127, %p128
    %p130 = scmp.ne.s32.totalorder %s119, %s120
    %p131 = scmp.eq.s32.totalorder %s15, 0
    %p132 = por %p130, %p131
    %p133 = scmp.ne.s32.totalorder %s119, %s120
    %p134 = scmp.eq.s32.totalorder %s16, 1
    %p135 = por %p133, %p134
    %p137 = scmp.ne.s32.totalorder %s120, %s136
    %p138 = scmp.eq.s32.totalorder %s16, 0
    %p139 = por %p137, %p138
    %p140 = scmp.le.s32.totalorder 1, %s10
    %p141 = scmp.lt.s32.totalorder %s10, 3
    %p142 = pnand %p140, %p141
    %p143 = pneg %p142
    // Predicated region
    $region9: #{grid_prediction_forward.1} parent=5 // pred_check
      _
    $region10: #{grid_prediction_forward.1} parent=5 // pred_check_branch
      %145 = sbr.rel (%p142) target = $region12
    $region11: #{grid_prediction_forward.1} parent=5 // pred_region
      %s146 = ssub.s32 %s10, 1
      // Predicated region
      $region13: #{grid_prediction_forward.1} parent=11 // pred_check
        %p147 = pneg %p85
      $region14: #{grid_prediction_forward.1} parent=11 // pred_check_branch
        %149 = sbr.rel (%p147) target = $region16
      $region15: #{grid_prediction_forward.1} parent=11 // pred_region
        _
      $region16: #{grid_prediction_forward.1} parent=11 // pred_fallthru
        _
      // Predicated region
      $region17: #{grid_prediction_forward.1} parent=11 // pred_check
        %p150 = pneg %p106
      $region18: #{grid_prediction_forward.1} parent=11 // pred_check_branch
        %152 = sbr.rel (%p150) target = $region20
      $region19: #{grid_prediction_forward.1} parent=11 // pred_region
        _
      $region20: #{grid_prediction_forward.1} parent=11 // pred_fallthru
        _
    $region12: #{grid_prediction_forward.1} parent=5 // pred_fallthru
      _
    %p153 = scmp.lt.s32.totalorder %s10, 2
    // Predicated region
    $region21: #{grid_prediction_forward.1} parent=5 // pred_check
      %p154 = pneg %p153
    $region22: #{grid_prediction_forward.1} parent=5 // pred_check_branch
      %156 = sbr.rel (%p154) target = $region24
    $region23: #{grid_prediction_forward.1} parent=5 // pred_region
      // Predicated region
      $region25: #{grid_prediction_forward.1} parent=23 // pred_check
        %p157 = pneg %p30
      $region26: #{grid_prediction_forward.1} parent=23 // pred_check_branch
        %159 = sbr.rel (%p157) target = $region28
      $region27: #{grid_prediction_forward.1} parent=23 // pred_region
        %s160 = smul.u32 4, %s10
        %p161 = scmp.lt.s32.totalorder %s160, 11
        %s162 = scalar_select %p161, %s160, 11
        %s163 = scalar_lea.vmem %s0, %s162
        %s164 = smul.u32 4, %s10
      $region28: #{grid_prediction_forward.1} parent=23 // pred_fallthru
        _
      // Predicated region
      $region29: #{grid_prediction_forward.1} parent=23 // pred_check
        %p165 = pneg %p58
      $region30: #{grid_prediction_forward.1} parent=23 // pred_check_branch
        %167 = sbr.rel (%p165) target = $region32
      $region31: #{grid_prediction_forward.1} parent=23 // pred_region
        %s168 = sadd.s32 %s10, 1
        %s169 = smul.u32 4, %s168
        %p170 = scmp.lt.s32.totalorder %s169, 11
        %s171 = scalar_select %p170, %s169, 11
        %s172 = scalar_lea.vmem %s1, %s171
        %s173 = sadd.s32 %s10, 1
        %s174 = smul.u32 4, %s173
      $region32: #{grid_prediction_forward.1} parent=23 // pred_fallthru
        _
    $region24: #{grid_prediction_forward.1} parent=5 // pred_fallthru
      _
    %p175 = scmp.le.s32.totalorder 1, %s10
    %p176 = scmp.lt.s32.totalorder %s10, 3
    %p177 = pnand %p175, %p176
    %p178 = pneg %p177
    // Predicated region
    $region33: #{grid_prediction_forward.1} parent=5 // pred_check
      _
    $region34: #{grid_prediction_forward.1} parent=5 // pred_check_branch
      %180 = sbr.rel (%p177) target = $region36
    $region35: #{grid_prediction_forward.1} parent=5 // pred_region
      %s181 = ssub.s32 %s10, 1
      %s182 = smul.u32 4, %s15
      %p183 = scmp.lt.s32.totalorder %s182, 11
      %s184 = scalar_select %p183, %s182, 11
      %s185 = scalar_lea.vmem %s0, %s184
      %p186 = pneg %p36
      %p187 = pneg %p33
      %s188 = sadd.s32 %s15, 1
      %s189 = smul.u32 4, %s188
      %p190 = scmp.lt.s32.totalorder %s189, 11
      %s191 = scalar_select %p190, %s189, 11
      %s192 = scalar_lea.vmem %s1, %s191
      %p193 = pneg %p64
      %p194 = pneg %p61
      %p195 = pneg %p85
      %p196 = pneg %p82
      %p197 = pneg %p106
      %p198 = pneg %p103
      %p199 = pneg %p132
      %p200 = pneg %p129
      %s201 = smul.u32 4, %s15
      %p202 = scmp.lt.s32.totalorder %s201, 7
      %s203 = scalar_select %p202, %s201, 7
      %s204 = scalar_lea.vmem %s4, %s203
      %s205 = smul.u32 4, %s15
      %p206 = scmp.lt.s32.totalorder %s205, 11
      %s207 = scalar_select %p206, %s205, 11
      %s208 = scalar_lea.vmem %s0, %s207
      %s209 = smul.u32 4, %s15
      %s210 = sadd.s32 %s15, 1
      %s211 = smul.u32 4, %s210
      %p212 = scmp.lt.s32.totalorder %s211, 11
      %s213 = scalar_select %p212, %s211, 11
      %s214 = scalar_lea.vmem %s1, %s213
      %s215 = sadd.s32 %s15, 1
      %s216 = smul.u32 4, %s215
      %s217 = smul.u32 4, %s15
      %p218 = scmp.lt.s32.totalorder %s217, 7
      %s219 = scalar_select %p218, %s217, 7
      %s220 = scalar_lea.vmem %s4, %s219
      %s221 = smul.u32 4, %s15
      %v222 = vld [vmem:[%s208] sm:$0xf]
      %v223 = vld [vmem:[%s214] sm:$0xf]
      %v225 = vlaneseq
      %v226 = vshrl.u32 %v225, 7
      %v227 = vsub.s32 0, %v226
      %v228 = vrot.slane %v222, %v227
      %v229 = vlaneseq
      %v230 = vshrl.u32 %v229, 7
      %v231 = vsub.s32 1, %v230
      %v232 = vrot.slane %v222, %v231
      %v233 = vlaneseq
      %v234 = vshrl.u32 %v233, 7
      %v235 = vsub.s32 2, %v234
      %v236 = vrot.slane %v222, %v235
      %v237 = vlaneseq
      %v238 = vshrl.u32 %v237, 7
      %v239 = vsub.s32 3, %v238
      %v240 = vrot.slane %v222, %v239
      %v246 = vlaneseq
      %v247 = vshrl.u32 %v246, 7
      %v248 = vsub.s32 0, %v247
      %v249 = vrot.slane %v223, %v248
      %v250 = vrot.slane %v228, 7
      %v251 = vrot.slane %v232, 7
      %v252 = vrot.slane %v236, 7
      %v253 = vrot.slane %v240, 7
      %v254 = vrot.slane %v249, 7
      %255 = vrot.lane.b32.xlu0 %v250, 127
      %v256 = vpop.permute.xlu0 %255
      %257 = vrot.lane.b32.xlu0 %v251, 127
      %v258 = vpop.permute.xlu0 %257
      %259 = vrot.lane.b32.xlu0 %v252, 127
      %v260 = vpop.permute.xlu0 %259
      %261 = vrot.lane.b32.xlu0 %v253, 127
      %v262 = vpop.permute.xlu0 %261
      %263 = vrot.lane.b32.xlu0 %v254, 127
      %v264 = vpop.permute.xlu0 %263
      %vm265 = vcmask 1039360
      %v266 = vsel %vm265, %v256, %v258
      %v267 = vsel %vm265, %v258, %v260
      %v268 = vsel %vm265, %v260, %v262
      %v269 = vsel %vm265, %v262, %v264
      %v274 = vrot.slane %v228, 6
      %v275 = vrot.slane %v232, 6
      %v276 = vrot.slane %v236, 6
      %v277 = vrot.slane %v240, 6
      %v278 = vrot.slane %v249, 6
      %279 = vrot.lane.b32.xlu0 %v274, 126
      %v280 = vpop.permute.xlu0 %279
      %281 = vrot.lane.b32.xlu0 %v275, 126
      %v282 = vpop.permute.xlu0 %281
      %283 = vrot.lane.b32.xlu0 %v276, 126
      %v284 = vpop.permute.xlu0 %283
      %285 = vrot.lane.b32.xlu0 %v277, 126
      %v286 = vpop.permute.xlu0 %285
      %287 = vrot.lane.b32.xlu0 %v278, 126
      %v288 = vpop.permute.xlu0 %287
      %vm289 = vcmask 1031168
      %v290 = vsel %vm289, %v280, %v282
      %v291 = vsel %vm289, %v282, %v284
      %v292 = vsel %vm289, %v284, %v286
      %v293 = vsel %vm289, %v286, %v288
      %v298 = vrot.slane %v228, 5
      %v299 = vrot.slane %v232, 5
      %v300 = vrot.slane %v236, 5
      %v301 = vrot.slane %v240, 5
      %v302 = vrot.slane %v249, 5
      %303 = vrot.lane.b32.xlu0 %v298, 108
      %v304 = vpop.permute.xlu0 %303
      %305 = vrot.lane.b32.xlu0 %v299, 108
      %v306 = vpop.permute.xlu0 %305
      %307 = vrot.lane.b32.xlu0 %v300, 108
      %v308 = vpop.permute.xlu0 %307
      %309 = vrot.lane.b32.xlu0 %v301, 108
      %v310 = vpop.permute.xlu0 %309
      %311 = vrot.lane.b32.xlu0 %v302, 108
      %v312 = vpop.permute.xlu0 %311
      %vm313 = vcmask 883712
      %v314 = vsel %vm313, %v304, %v306
      %v315 = vsel %vm313, %v306, %v308
      %v316 = vsel %vm313, %v308, %v310
      %v317 = vsel %vm313, %v310, %v312
      %v322 = vrot.slane %v228, 4
      %v323 = vrot.slane %v232, 4
      %v324 = vrot.slane %v236, 4
      %v325 = vrot.slane %v240, 4
      %v326 = vrot.slane %v249, 4
      %327 = vrot.lane.b32.xlu0 %v322, 107
      %v328 = vpop.permute.xlu0 %327
      %329 = vrot.lane.b32.xlu0 %v323, 107
      %v330 = vpop.permute.xlu0 %329
      %331 = vrot.lane.b32.xlu0 %v324, 107
      %v332 = vpop.permute.xlu0 %331
      %333 = vrot.lane.b32.xlu0 %v325, 107
      %v334 = vpop.permute.xlu0 %333
      %335 = vrot.lane.b32.xlu0 %v326, 107
      %v336 = vpop.permute.xlu0 %335
      %vm337 = vcmask 875520
      %v338 = vsel %vm337, %v328, %v330
      %v339 = vsel %vm337, %v330, %v332
      %v340 = vsel %vm337, %v332, %v334
      %v341 = vsel %vm337, %v334, %v336
      %v346 = vrot.slane %v228, 3
      %v347 = vrot.slane %v232, 3
      %v348 = vrot.slane %v236, 3
      %v349 = vrot.slane %v240, 3
      %v350 = vrot.slane %v249, 3
      %351 = vrot.lane.b32.xlu0 %v346, 106
      %v352 = vpop.permute.xlu0 %351
      %353 = vrot.lane.b32.xlu0 %v347, 106
      %v354 = vpop.permute.xlu0 %353
      %355 = vrot.lane.b32.xlu0 %v348, 106
      %v356 = vpop.permute.xlu0 %355
      %357 = vrot.lane.b32.xlu0 %v349, 106
      %v358 = vpop.permute.xlu0 %357
      %359 = vrot.lane.b32.xlu0 %v350, 106
      %v360 = vpop.permute.xlu0 %359
      %vm361 = vcmask 867328
      %v362 = vsel %vm361, %v352, %v354
      %v363 = vsel %vm361, %v354, %v356
      %v364 = vsel %vm361, %v356, %v358
      %v365 = vsel %vm361, %v358, %v360
      %v370 = vrot.slane %v228, 2
      %v371 = vrot.slane %v232, 2
      %v372 = vrot.slane %v236, 2
      %v373 = vrot.slane %v240, 2
      %v374 = vrot.slane %v249, 2
      %375 = vrot.lane.b32.xlu0 %v370, 88
      %v376 = vpop.permute.xlu0 %375
      %377 = vrot.lane.b32.xlu0 %v371, 88
      %v378 = vpop.permute.xlu0 %377
      %379 = vrot.lane.b32.xlu0 %v372, 88
      %v380 = vpop.permute.xlu0 %379
      %381 = vrot.lane.b32.xlu0 %v373, 88
      %v382 = vpop.permute.xlu0 %381
      %383 = vrot.lane.b32.xlu0 %v374, 88
      %v384 = vpop.permute.xlu0 %383
      %vm385 = vcmask 719872
      %v386 = vsel %vm385, %v376, %v378
      %v387 = vsel %vm385, %v378, %v380
      %v388 = vsel %vm385, %v380, %v382
      %v389 = vsel %vm385, %v382, %v384
      %v394 = vrot.slane %v228, 1
      %v395 = vrot.slane %v232, 1
      %v396 = vrot.slane %v236, 1
      %v397 = vrot.slane %v240, 1
      %v398 = vrot.slane %v249, 1
      %399 = vrot.lane.b32.xlu0 %v394, 87
      %v400 = vpop.permute.xlu0 %399
      %401 = vrot.lane.b32.xlu0 %v395, 87
      %v402 = vpop.permute.xlu0 %401
      %403 = vrot.lane.b32.xlu0 %v396, 87
      %v404 = vpop.permute.xlu0 %403
      %405 = vrot.lane.b32.xlu0 %v397, 87
      %v406 = vpop.permute.xlu0 %405
      %407 = vrot.lane.b32.xlu0 %v398, 87
      %v408 = vpop.permute.xlu0 %407
      %vm409 = vcmask 711680
      %v410 = vsel %vm409, %v400, %v402
      %v411 = vsel %vm409, %v402, %v404
      %v412 = vsel %vm409, %v404, %v406
      %v413 = vsel %vm409, %v406, %v408
      %418 = vrot.lane.b32.xlu0 %v228, 86
      %v419 = vpop.permute.xlu0 %418
      %420 = vrot.lane.b32.xlu0 %v232, 86
      %v421 = vpop.permute.xlu0 %420
      %422 = vrot.lane.b32.xlu0 %v236, 86
      %v423 = vpop.permute.xlu0 %422
      %424 = vrot.lane.b32.xlu0 %v240, 86
      %v425 = vpop.permute.xlu0 %424
      %426 = vrot.lane.b32.xlu0 %v249, 86
      %v427 = vpop.permute.xlu0 %426
      %vm428 = vcmask 703488
      %v429 = vsel %vm428, %v419, %v421
      %v430 = vsel %vm428, %v421, %v423
      %v431 = vsel %vm428, %v423, %v425
      %v432 = vsel %vm428, %v425, %v427
      %vm437 = vcmask 1040384
      %v438 = vsel %vm437, %v228, %v266
      %v439 = vsel %vm437, %v232, %v267
      %v440 = vsel %vm437, %v236, %v268
      %v441 = vsel %vm437, %v240, %v269
      %vm442 = vcmask 1041408
      %v443 = vsel %vm442, %v438, %v290
      %v444 = vsel %vm442, %v439, %v291
      %v445 = vsel %vm442, %v440, %v292
      %v446 = vsel %vm442, %v441, %v293
      %vm447 = vcmask 1042432
      %v448 = vsel %vm447, %v443, %v314
      %v449 = vsel %vm447, %v444, %v315
      %v450 = vsel %vm447, %v445, %v316
      %v451 = vsel %vm447, %v446, %v317
      %vm452 = vcmask 1043456
      %v453 = vsel %vm452, %v448, %v338
      %v454 = vsel %vm452, %v449, %v339
      %v455 = vsel %vm452, %v450, %v340
      %v456 = vsel %vm452, %v451, %v341
      %vm457 = vcmask 1044480
      %v458 = vsel %vm457, %v453, %v362
      %v459 = vsel %vm457, %v454, %v363
      %v460 = vsel %vm457, %v455, %v364
      %v461 = vsel %vm457, %v456, %v365
      %vm462 = vcmask 1045504
      %v463 = vsel %vm462, %v458, %v386
      %v464 = vsel %vm462, %v459, %v387
      %v465 = vsel %vm462, %v460, %v388
      %v466 = vsel %vm462, %v461, %v389
      %vm467 = vcmask 1046528
      %v468 = vsel %vm467, %v463, %v410
      %v469 = vsel %vm467, %v464, %v411
      %v470 = vsel %vm467, %v465, %v412
      %v471 = vsel %vm467, %v466, %v413
      %v472 = vsel %vm437, %v429, 1.0
      %v473 = vsel %vm437, %v430, 1.0
      %v474 = vsel %vm437, %v431, 1.0
      %v475 = vsel %vm437, %v432, 1.0
      %v476 = vsel %vm442, %v472, 0.0
      %v477 = vsel %vm442, %v473, 0.0
      %v478 = vsel %vm442, %v474, 0.0
      %v479 = vsel %vm442, %v475, 0.0
      %v480 = vld [vmem:[%s2] sm:$0xff]
      %v481 = vld [vmem:[%s2 + $0x8] sm:$0xff]
      %v482 = vld [vmem:[%s2 + $0x10] sm:$0xff]
      %v483 = vld [vmem:[%s2 + $0x18] sm:$0xff]
      %v484 = vld [vmem:[%s2 + $0x20] sm:$0xff]
      %v485 = vld [vmem:[%s2 + $0x28] sm:$0xff]
      %v486 = vld [vmem:[%s2 + $0x30] sm:$0xff]
      %v487 = vld [vmem:[%s2 + $0x38] sm:$0xff]
      %v488 = vld [vmem:[%s2 + $0x40] sm:$0xff]
      %v489 = vld [vmem:[%s2 + $0x48] sm:$0xff]
      %v490 = vld [vmem:[%s2 + $0x50] sm:$0xff]
      %v491 = vld [vmem:[%s2 + $0x58] sm:$0xff]
      %v492 = vld [vmem:[%s2 + $0x60] sm:$0xff]
      %v493 = vld [vmem:[%s2 + $0x68] sm:$0xff]
      %v494 = vld [vmem:[%s2 + $0x70] sm:$0xff]
      %v495 = vld [vmem:[%s2 + $0x78] sm:$0xff]
      %vm496 = vcmask 130048
      %v498 = vsel %vm496, %v480, 0
      %v501 = vsel %vm496, %v481, 0
      %v504 = vsel %vm496, %v482, 0
      %v507 = vsel %vm496, %v483, 0
      %v510 = vsel %vm496, %v484, 0
      %v513 = vsel %vm496, %v485, 0
      %v516 = vsel %vm496, %v486, 0
      %v519 = vsel %vm496, %v487, 0
      %v522 = vsel %vm496, %v488, 0
      %v525 = vsel %vm496, %v489, 0
      %v528 = vsel %vm496, %v490, 0
      %v531 = vsel %vm496, %v491, 0
      %v534 = vsel %vm496, %v492, 0
      %v537 = vsel %vm496, %v493, 0
      %v540 = vsel %vm496, %v494, 0
      %v543 = vsel %vm496, %v495, 0
      %545 = vmatprep.subr.mxu0 %v469
      %546 = vmatpush1.msra.mxu0 %v468
      %547 = vmatprep.subr.mxu0 %v477
      %548 = vmatpush1.msra.mxu0 %v476
      %549 = vmatprep.subr.mxu0 0.0
      %550 = vmatpush1.msra.mxu0 0.0
      %551 = vmatprep.subr.mxu0 0.0
      %552 = vmatpush1.msra.mxu0 0.0
      %553 = vmatprep.subr.mxu0 0.0
      %554 = vmatpush1.msra.mxu0 0.0
      %555 = vmatprep.subr.mxu0 0.0
      %556 = vmatpush1.msra.mxu0 0.0
      %557 = vmatprep.subr.mxu0 0.0
      %558 = vmatpush1.msra.mxu0 0.0
      %559 = vmatprep.subr.mxu0 0.0
      %560 = vmatpush1.msra.mxu0 0.0
      %561 = vmatprep.subr.mxu0 0.0
      %562 = vmatpush1.msra.mxu0 0.0
      %563 = vmatprep.subr.mxu0 0.0
      %564 = vmatpush1.msra.mxu0 0.0
      %565 = vmatprep.subr.mxu0 0.0
      %566 = vmatpush1.msra.mxu0 0.0
      %567 = vmatprep.subr.mxu0 0.0
      %568 = vmatpush1.msra.mxu0 0.0
      %569 = vmatprep.subr.mxu0 0.0
      %570 = vmatpush1.msra.mxu0 0.0
      %571 = vmatprep.subr.mxu0 0.0
      %572 = vmatpush1.msra.mxu0 0.0
      %573 = vmatprep.subr.mxu0 0.0
      %574 = vmatpush1.msra.mxu0 0.0
      %575 = vmatprep.subr.mxu0 0.0
      %576 = vmatpush1.msra.mxu0 0.0
      %577 = vmatprep.subr.mxu0 0.0
      %578 = vmatpush1.msra.mxu0 0.0
      %579 = vmatprep.subr.mxu0 0.0
      %580 = vmatpush1.msra.mxu0 0.0
      %581 = vmatprep.subr.mxu0 0.0
      %582 = vmatpush1.msra.mxu0 0.0
      %583 = vmatprep.subr.mxu0 0.0
      %584 = vmatpush1.msra.mxu0 0.0
      %585 = vmatprep.subr.mxu0 0.0
      %586 = vmatpush1.msra.mxu0 0.0
      %587 = vmatprep.subr.mxu0 0.0
      %588 = vmatpush1.msra.mxu0 0.0
      %589 = vmatprep.subr.mxu0 0.0
      %590 = vmatpush1.msra.mxu0 0.0
      %591 = vmatprep.subr.mxu0 0.0
      %592 = vmatpush1.msra.mxu0 0.0
      %593 = vmatprep.subr.mxu0 0.0
      %594 = vmatpush1.msra.mxu0 0.0
      %595 = vmatprep.subr.mxu0 0.0
      %596 = vmatpush1.msra.mxu0 0.0
      %597 = vmatprep.subr.mxu0 0.0
      %598 = vmatpush1.msra.mxu0 0.0
      %599 = vmatprep.subr.mxu0 0.0
      %600 = vmatpush1.msra.mxu0 0.0
      %601 = vmatprep.subr.mxu0 0.0
      %602 = vmatpush1.msra.mxu0 0.0
      %603 = vmatprep.subr.mxu0 0.0
      %604 = vmatpush1.msra.mxu0 0.0
      %605 = vmatprep.subr.mxu0 0.0
      %606 = vmatpush1.msra.mxu0 0.0
      %607 = vmatprep.subr.mxu0 0.0
      %608 = vmatpush1.msra.mxu0 0.0
      %609 = vmatprep.mubr.f32.mxu0 0.0
      %610 = vmatmul.mubr.f32.gmra.mrb[0].mxu0 %v498
      %v611 = vpop.f32.mrb[0].mxu0
      %v612 = vadd.f32 0.0, %v611
      %v613 = vpop.f32.mrb[0].mxu0
      %v614 = vadd.f32 0.0, %v613
      %615 = vmatprep.mubr.f32.mxu0 0.0
      %616 = vmatmul.mubr.f32.gmra.mrb[0].mxu0 %v501
      %v617 = vpop.f32.mrb[0].mxu0
      %v618 = vadd.f32 0.0, %v617
      %v619 = vpop.f32.mrb[0].mxu0
      %v620 = vadd.f32 0.0, %v619
      %621 = vmatprep.mubr.f32.mxu0 0.0
      %622 = vmatmul.mubr.f32.gmra.mrb[0].mxu0 %v504
      %v623 = vpop.f32.mrb[0].mxu0
      %v624 = vadd.f32 0.0, %v623
      %v625 = vpop.f32.mrb[0].mxu0
      %v626 = vadd.f32 0.0, %v625
      %627 = vmatprep.mubr.f32.mxu0 0.0
      %628 = vmatmul.mubr.f32.gmra.mrb[0].mxu0 %v507
      %v629 = vpop.f32.mrb[0].mxu0
      %v630 = vadd.f32 0.0, %v629
      %v631 = vpop.f32.mrb[0].mxu0
      %v632 = vadd.f32 0.0, %v631
      %633 = vmatprep.mubr.f32.mxu0 0.0
      %634 = vmatmul.mubr.f32.gmra.mrb[0].mxu0 %v510
      %v635 = vpop.f32.mrb[0].mxu0
      %v636 = vadd.f32 0.0, %v635
      %v637 = vpop.f32.mrb[0].mxu0
      %v638 = vadd.f32 0.0, %v637
      %639 = vmatprep.mubr.f32.mxu0 0.0
      %640 = vmatmul.mubr.f32.gmra.mrb[0].mxu0 %v513
      %v641 = vpop.f32.mrb[0].mxu0
      %v642 = vadd.f32 0.0, %v641
      %v643 = vpop.f32.mrb[0].mxu0
      %v644 = vadd.f32 0.0, %v643
      %645 = vmatprep.mubr.f32.mxu0 0.0
      %646 = vmatmul.mubr.f32.gmra.mrb[0].mxu0 %v516
      %v647 = vpop.f32.mrb[0].mxu0
      %v648 = vadd.f32 0.0, %v647
      %v649 = vpop.f32.mrb[0].mxu0
      %v650 = vadd.f32 0.0, %v649
      %651 = vmatprep.mubr.f32.mxu0 0.0
      %652 = vmatmul.mubr.f32.gmra.mrb[0].mxu0 %v519
      %v653 = vpop.f32.mrb[0].mxu0
      %v654 = vadd.f32 0.0, %v653
      %v655 = vpop.f32.mrb[0].mxu0
      %v656 = vadd.f32 0.0, %v655
      %657 = vmatprep.mubr.f32.mxu0 0.0
      %658 = vmatmul.mubr.f32.gmra.mrb[0].mxu0 %v522
      %v659 = vpop.f32.mrb[0].mxu0
      %v660 = vadd.f32 0.0, %v659
      %v661 = vpop.f32.mrb[0].mxu0
      %v662 = vadd.f32 0.0, %v661
      %663 = vmatprep.mubr.f32.mxu0 0.0
      %664 = vmatmul.mubr.f32.gmra.mrb[0].mxu0 %v525
      %v665 = vpop.f32.mrb[0].mxu0
      %v666 = vadd.f32 0.0, %v665
      %v667 = vpop.f32.mrb[0].mxu0
      %v668 = vadd.f32 0.0, %v667
      %669 = vmatprep.mubr.f32.mxu0 0.0
      %670 = vmatmul.mubr.f32.gmra.mrb[0].mxu0 %v528
      %v671 = vpop.f32.mrb[0].mxu0
      %v672 = vadd.f32 0.0, %v671
      %v673 = vpop.f32.mrb[0].mxu0
      %v674 = vadd.f32 0.0, %v673
      %675 = vmatprep.mubr.f32.mxu0 0.0
      %676 = vmatmul.mubr.f32.gmra.mrb[0].mxu0 %v531
      %v677 = vpop.f32.mrb[0].mxu0
      %v678 = vadd.f32 0.0, %v677
      %v679 = vpop.f32.mrb[0].mxu0
      %v680 = vadd.f32 0.0, %v679
      %681 = vmatprep.mubr.f32.mxu0 0.0
      %682 = vmatmul.mubr.f32.gmra.mrb[0].mxu0 %v534
      %v683 = vpop.f32.mrb[0].mxu0
      %v684 = vadd.f32 0.0, %v683
      %v685 = vpop.f32.mrb[0].mxu0
      %v686 = vadd.f32 0.0, %v685
      %687 = vmatprep.mubr.f32.mxu0 0.0
      %688 = vmatmul.mubr.f32.gmra.mrb[0].mxu0 %v537
      %v689 = vpop.f32.mrb[0].mxu0
      %v690 = vadd.f32 0.0, %v689
      %v691 = vpop.f32.mrb[0].mxu0
      %v692 = vadd.f32 0.0, %v691
      %693 = vmatprep.mubr.f32.mxu0 0.0
      %694 = vmatmul.mubr.f32.gmra.mrb[0].mxu0 %v540
      %v695 = vpop.f32.mrb[0].mxu0
      %v696 = vadd.f32 0.0, %v695
      %v697 = vpop.f32.mrb[0].mxu0
      %v698 = vadd.f32 0.0, %v697
      %699 = vmatprep.mubr.f32.mxu0 0.0
      %700 = vmatmul.mubr.f32.gmra.mrb[0].mxu0 %v543
      %v701 = vpop.f32.mrb[0].mxu0
      %v702 = vadd.f32 0.0, %v701
      %v703 = vpop.f32.mrb[0].mxu0
      %v704 = vadd.f32 0.0, %v703
      %705 = vdwg.mxu0
      %706 = vmatprep.subr.mxu0 %v471
      %707 = vmatpush1.msra.mxu0 %v470
      %708 = vmatprep.subr.mxu0 %v479
      %709 = vmatpush1.msra.mxu0 %v478
      %710 = vmatprep.subr.mxu0 0.0
      %711 = vmatpush1.msra.mxu0 0.0
      %712 = vmatprep.subr.mxu0 0.0
      %713 = vmatpush1.msra.mxu0 0.0
      %714 = vmatprep.subr.mxu0 0.0
      %715 = vmatpush1.msra.mxu0 0.0
      %716 = vmatprep.subr.mxu0 0.0
      %717 = vmatpush1.msra.mxu0 0.0
      %718 = vmatprep.subr.mxu0 0.0
      %719 = vmatpush1.msra.mxu0 0.0
      %720 = vmatprep.subr.mxu0 0.0
      %721 = vmatpush1.msra.mxu0 0.0
      %722 = vmatprep.subr.mxu0 0.0
      %723 = vmatpush1.msra.mxu0 0.0
      %724 = vmatprep.subr.mxu0 0.0
      %725 = vmatpush1.msra.mxu0 0.0
      %726 = vmatprep.subr.mxu0 0.0
      %727 = vmatpush1.msra.mxu0 0.0
      %728 = vmatprep.subr.mxu0 0.0
      %729 = vmatpush1.msra.mxu0 0.0
      %730 = vmatprep.subr.mxu0 0.0
      %731 = vmatpush1.msra.mxu0 0.0
      %732 = vmatprep.subr.mxu0 0.0
      %733 = vmatpush1.msra.mxu0 0.0
      %734 = vmatprep.subr.mxu0 0.0
      %735 = vmatpush1.msra.mxu0 0.0
      %736 = vmatprep.subr.mxu0 0.0
      %737 = vmatpush1.msra.mxu0 0.0
      %738 = vmatprep.subr.mxu0 0.0
      %739 = vmatpush1.msra.mxu0 0.0
      %740 = vmatprep.subr.mxu0 0.0
      %741 = vmatpush1.msra.mxu0 0.0
      %742 = vmatprep.subr.mxu0 0.0
      %743 = vmatpush1.msra.mxu0 0.0
      %744 = vmatprep.subr.mxu0 0.0
      %745 = vmatpush1.msra.mxu0 0.0
      %746 = vmatprep.subr.mxu0 0.0
      %747 = vmatpush1.msra.mxu0 0.0
      %748 = vmatprep.subr.mxu0 0.0
      %749 = vmatpush1.msra.mxu0 0.0
      %750 = vmatprep.subr.mxu0 0.0
      %751 = vmatpush1.msra.mxu0 0.0
      %752 = vmatprep.subr.mxu0 0.0
      %753 = vmatpush1.msra.mxu0 0.0
      %754 = vmatprep.subr.mxu0 0.0
      %755 = vmatpush1.msra.mxu0 0.0
      %756 = vmatprep.subr.mxu0 0.0
      %757 = vmatpush1.msra.mxu0 0.0
      %758 = vmatprep.subr.mxu0 0.0
      %759 = vmatpush1.msra.mxu0 0.0
      %760 = vmatprep.subr.mxu0 0.0
      %761 = vmatpush1.msra.mxu0 0.0
      %762 = vmatprep.subr.mxu0 0.0
      %763 = vmatpush1.msra.mxu0 0.0
      %764 = vmatprep.subr.mxu0 0.0
      %765 = vmatpush1.msra.mxu0 0.0
      %766 = vmatprep.subr.mxu0 0.0
      %767 = vmatpush1.msra.mxu0 0.0
      %768 = vmatprep.subr.mxu0 0.0
      %769 = vmatpush1.msra.mxu0 0.0
      %770 = vmatprep.mubr.f32.mxu0 0.0
      %771 = vmatmul.mubr.f32.gmra.mrb[0].mxu0 %v498
      %v772 = vpop.f32.mrb[0].mxu0
      %v773 = vadd.f32 0.0, %v772
      %v774 = vpop.f32.mrb[0].mxu0
      %v775 = vadd.f32 0.0, %v774
      %776 = vmatprep.mubr.f32.mxu0 0.0
      %777 = vmatmul.mubr.f32.gmra.mrb[0].mxu0 %v501
      %v778 = vpop.f32.mrb[0].mxu0
      %v779 = vadd.f32 0.0, %v778
      %v780 = vpop.f32.mrb[0].mxu0
      %v781 = vadd.f32 0.0, %v780
      %782 = vmatprep.mubr.f32.mxu0 0.0
      %783 = vmatmul.mubr.f32.gmra.mrb[0].mxu0 %v504
      %v784 = vpop.f32.mrb[0].mxu0
      %v785 = vadd.f32 0.0, %v784
      %v786 = vpop.f32.mrb[0].mxu0
      %v787 = vadd.f32 0.0, %v786
      %788 = vmatprep.mubr.f32.mxu0 0.0
      %789 = vmatmul.mubr.f32.gmra.mrb[0].mxu0 %v507
      %v790 = vpop.f32.mrb[0].mxu0
      %v791 = vadd.f32 0.0, %v790
      %v792 = vpop.f32.mrb[0].mxu0
      %v793 = vadd.f32 0.0, %v792
      %794 = vmatprep.mubr.f32.mxu0 0.0
      %795 = vmatmul.mubr.f32.gmra.mrb[0].mxu0 %v510
      %v796 = vpop.f32.mrb[0].mxu0
      %v797 = vadd.f32 0.0, %v796
      %v798 = vpop.f32.mrb[0].mxu0
      %v799 = vadd.f32 0.0, %v798
      %800 = vmatprep.mubr.f32.mxu0 0.0
      %801 = vmatmul.mubr.f32.gmra.mrb[0].mxu0 %v513
      %v802 = vpop.f32.mrb[0].mxu0
      %v803 = vadd.f32 0.0, %v802
      %v804 = vpop.f32.mrb[0].mxu0
      %v805 = vadd.f32 0.0, %v804
      %806 = vmatprep.mubr.f32.mxu0 0.0
      %807 = vmatmul.mubr.f32.gmra.mrb[0].mxu0 %v516
      %v808 = vpop.f32.mrb[0].mxu0
      %v809 = vadd.f32 0.0, %v808
      %v810 = vpop.f32.mrb[0].mxu0
      %v811 = vadd.f32 0.0, %v810
      %812 = vmatprep.mubr.f32.mxu0 0.0
      %813 = vmatmul.mubr.f32.gmra.mrb[0].mxu0 %v519
      %v814 = vpop.f32.mrb[0].mxu0
      %v815 = vadd.f32 0.0, %v814
      %v816 = vpop.f32.mrb[0].mxu0
      %v817 = vadd.f32 0.0, %v816
      %818 = vmatprep.mubr.f32.mxu0 0.0
      %819 = vmatmul.mubr.f32.gmra.mrb[0].mxu0 %v522
      %v820 = vpop.f32.mrb[0].mxu0
      %v821 = vadd.f32 0.0, %v820
      %v822 = vpop.f32.mrb[0].mxu0
      %v823 = vadd.f32 0.0, %v822
      %824 = vmatprep.mubr.f32.mxu0 0.0
      %825 = vmatmul.mubr.f32.gmra.mrb[0].mxu0 %v525
      %v826 = vpop.f32.mrb[0].mxu0
      %v827 = vadd.f32 0.0, %v826
      %v828 = vpop.f32.mrb[0].mxu0
      %v829 = vadd.f32 0.0, %v828
      %830 = vmatprep.mubr.f32.mxu0 0.0
      %831 = vmatmul.mubr.f32.gmra.mrb[0].mxu0 %v528
      %v832 = vpop.f32.mrb[0].mxu0
      %v833 = vadd.f32 0.0, %v832
      %v834 = vpop.f32.mrb[0].mxu0
      %v835 = vadd.f32 0.0, %v834
      %836 = vmatprep.mubr.f32.mxu0 0.0
      %837 = vmatmul.mubr.f32.gmra.mrb[0].mxu0 %v531
      %v838 = vpop.f32.mrb[0].mxu0
      %v839 = vadd.f32 0.0, %v838
      %v840 = vpop.f32.mrb[0].mxu0
      %v841 = vadd.f32 0.0, %v840
      %842 = vmatprep.mubr.f32.mxu0 0.0
      %843 = vmatmul.mubr.f32.gmra.mrb[0].mxu0 %v534
      %v844 = vpop.f32.mrb[0].mxu0
      %v845 = vadd.f32 0.0, %v844
      %v846 = vpop.f32.mrb[0].mxu0
      %v847 = vadd.f32 0.0, %v846
      %848 = vmatprep.mubr.f32.mxu0 0.0
      %849 = vmatmul.mubr.f32.gmra.mrb[0].mxu0 %v537
      %v850 = vpop.f32.mrb[0].mxu0
      %v851 = vadd.f32 0.0, %v850
      %v852 = vpop.f32.mrb[0].mxu0
      %v853 = vadd.f32 0.0, %v852
      %854 = vmatprep.mubr.f32.mxu0 0.0
      %855 = vmatmul.mubr.f32.gmra.mrb[0].mxu0 %v540
      %v856 = vpop.f32.mrb[0].mxu0
      %v857 = vadd.f32 0.0, %v856
      %v858 = vpop.f32.mrb[0].mxu0
      %v859 = vadd.f32 0.0, %v858
      %860 = vmatprep.mubr.f32.mxu0 0.0
      %861 = vmatmul.mubr.f32.gmra.mrb[0].mxu0 %v543
      %v862 = vpop.f32.mrb[0].mxu0
      %v863 = vadd.f32 0.0, %v862
      %v864 = vpop.f32.mrb[0].mxu0
      %v865 = vadd.f32 0.0, %v864
      %866 = vdwg.mxu0
      %v867 = vmax.f32 %v612, 0.0
      %v868 = vmax.f32 %v614, 0.0
      %v869 = vmax.f32 %v773, 0.0
      %v870 = vmax.f32 %v775, 0.0
      %v871 = vmax.f32 %v618, 0.0
      %v872 = vmax.f32 %v620, 0.0
      %v873 = vmax.f32 %v779, 0.0
      %v874 = vmax.f32 %v781, 0.0
      %v875 = vmax.f32 %v624, 0.0
      %v876 = vmax.f32 %v626, 0.0
      %v877 = vmax.f32 %v785, 0.0
      %v878 = vmax.f32 %v787, 0.0
      %v879 = vmax.f32 %v630, 0.0
      %v880 = vmax.f32 %v632, 0.0
      %v881 = vmax.f32 %v791, 0.0
      %v882 = vmax.f32 %v793, 0.0
      %v883 = vmax.f32 %v636, 0.0
      %v884 = vmax.f32 %v638, 0.0
      %v885 = vmax.f32 %v797, 0.0
      %v886 = vmax.f32 %v799, 0.0
      %v887 = vmax.f32 %v642, 0.0
      %v888 = vmax.f32 %v644, 0.0
      %v889 = vmax.f32 %v803, 0.0
      %v890 = vmax.f32 %v805, 0.0
      %v891 = vmax.f32 %v648, 0.0
      %v892 = vmax.f32 %v650, 0.0
      %v893 = vmax.f32 %v809, 0.0
      %v894 = vmax.f32 %v811, 0.0
      %v895 = vmax.f32 %v654, 0.0
      %v896 = vmax.f32 %v656, 0.0
      %v897 = vmax.f32 %v815, 0.0
      %v898 = vmax.f32 %v817, 0.0
      %v899 = vmax.f32 %v660, 0.0
      %v900 = vmax.f32 %v662, 0.0
      %v901 = vmax.f32 %v821, 0.0
      %v902 = vmax.f32 %v823, 0.0
      %v903 = vmax.f32 %v666, 0.0
      %v904 = vmax.f32 %v668, 0.0
      %v905 = vmax.f32 %v827, 0.0
      %v906 = vmax.f32 %v829, 0.0
      %v907 = vmax.f32 %v672, 0.0
      %v908 = vmax.f32 %v674, 0.0
      %v909 = vmax.f32 %v833, 0.0
      %v910 = vmax.f32 %v835, 0.0
      %v911 = vmax.f32 %v678, 0.0
      %v912 = vmax.f32 %v680, 0.0
      %v913 = vmax.f32 %v839, 0.0
      %v914 = vmax.f32 %v841, 0.0
      %v915 = vmax.f32 %v684, 0.0
      %v916 = vmax.f32 %v686, 0.0
      %v917 = vmax.f32 %v845, 0.0
      %v918 = vmax.f32 %v847, 0.0
      %v919 = vmax.f32 %v690, 0.0
      %v920 = vmax.f32 %v692, 0.0
      %v921 = vmax.f32 %v851, 0.0
      %v922 = vmax.f32 %v853, 0.0
      %v923 = vmax.f32 %v696, 0.0
      %v924 = vmax.f32 %v698, 0.0
      %v925 = vmax.f32 %v857, 0.0
      %v926 = vmax.f32 %v859, 0.0
      %v927 = vmax.f32 %v702, 0.0
      %v928 = vmax.f32 %v704, 0.0
      %v929 = vmax.f32 %v863, 0.0
      %v930 = vmax.f32 %v865, 0.0
      %v931 = vld [vmem:[%s3] sm:$0x1]
      %932 = vmatprep.subr.mxu0 %v868
      %933 = vmatpush1.msra.mxu0 %v867
      %934 = vmatprep.subr.mxu0 %v872
      %935 = vmatpush1.msra.mxu0 %v871
      %936 = vmatprep.subr.mxu0 %v876
      %937 = vmatpush1.msra.mxu0 %v875
      %938 = vmatprep.subr.mxu0 %v880
      %939 = vmatpush1.msra.mxu0 %v879
      %940 = vmatprep.subr.mxu0 %v884
      %941 = vmatpush1.msra.mxu0 %v883
      %942 = vmatprep.subr.mxu0 %v888
      %943 = vmatpush1.msra.mxu0 %v887
      %944 = vmatprep.subr.mxu0 %v892
      %945 = vmatpush1.msra.mxu0 %v891
      %946 = vmatprep.subr.mxu0 %v896
      %947 = vmatpush1.msra.mxu0 %v895
      %948 = vmatprep.subr.mxu0 %v900
      %949 = vmatpush1.msra.mxu0 %v899
      %950 = vmatprep.subr.mxu0 %v904
      %951 = vmatpush1.msra.mxu0 %v903
      %952 = vmatprep.subr.mxu0 %v908
      %953 = vmatpush1.msra.mxu0 %v907
      %954 = vmatprep.subr.mxu0 %v912
      %955 = vmatpush1.msra.mxu0 %v911
      %956 = vmatprep.subr.mxu0 %v916
      %957 = vmatpush1.msra.mxu0 %v915
      %958 = vmatprep.subr.mxu0 %v920
      %959 = vmatpush1.msra.mxu0 %v919
      %960 = vmatprep.subr.mxu0 %v924
      %961 = vmatpush1.msra.mxu0 %v923
      %962 = vmatprep.subr.mxu0 %v928
      %963 = vmatpush1.msra.mxu0 %v927
      %964 = vmatprep.subr.mxu0 0.0
      %965 = vmatpush1.msra.mxu0 0.0
      %966 = vmatprep.subr.mxu0 0.0
      %967 = vmatpush1.msra.mxu0 0.0
      %968 = vmatprep.subr.mxu0 0.0
      %969 = vmatpush1.msra.mxu0 0.0
      %970 = vmatprep.subr.mxu0 0.0
      %971 = vmatpush1.msra.mxu0 0.0
      %972 = vmatprep.subr.mxu0 0.0
      %973 = vmatpush1.msra.mxu0 0.0
      %974 = vmatprep.subr.mxu0 0.0
      %975 = vmatpush1.msra.mxu0 0.0
      %976 = vmatprep.subr.mxu0 0.0
      %977 = vmatpush1.msra.mxu0 0.0
      %978 = vmatprep.subr.mxu0 0.0
      %979 = vmatpush1.msra.mxu0 0.0
      %980 = vmatprep.subr.mxu0 0.0
      %981 = vmatpush1.msra.mxu0 0.0
      %982 = vmatprep.subr.mxu0 0.0
      %983 = vmatpush1.msra.mxu0 0.0
      %984 = vmatprep.subr.mxu0 0.0
      %985 = vmatpush1.msra.mxu0 0.0
      %986 = vmatprep.subr.mxu0 0.0
      %987 = vmatpush1.msra.mxu0 0.0
      %988 = vmatprep.subr.mxu0 0.0
      %989 = vmatpush1.msra.mxu0 0.0
      %990 = vmatprep.subr.mxu0 0.0
      %991 = vmatpush1.msra.mxu0 0.0
      %992 = vmatprep.subr.mxu0 0.0
      %993 = vmatpush1.msra.mxu0 0.0
      %994 = vmatprep.subr.mxu0 0.0
      %995 = vmatpush1.msra.mxu0 0.0
      %996 = vmatprep.mubr.f32.mxu0 0.0
      %997 = vmatmul.mubr.f32.gmra.mrb[0].mxu0 %v931
      %v998 = vpop.f32.mrb[0].mxu0
      %v999 = vadd.f32 0.0, %v998
      %v1000 = vpop.f32.mrb[0].mxu0
      %v1001 = vadd.f32 0.0, %v1000
      %1002 = vdwg.mxu0
      %1003 = vmatprep.subr.mxu0 %v870
      %1004 = vmatpush1.msra.mxu0 %v869
      %1005 = vmatprep.subr.mxu0 %v874
      %1006 = vmatpush1.msra.mxu0 %v873
      %1007 = vmatprep.subr.mxu0 %v878
      %1008 = vmatpush1.msra.mxu0 %v877
      %1009 = vmatprep.subr.mxu0 %v882
      %1010 = vmatpush1.msra.mxu0 %v881
      %1011 = vmatprep.subr.mxu0 %v886
      %1012 = vmatpush1.msra.mxu0 %v885
      %1013 = vmatprep.subr.mxu0 %v890
      %1014 = vmatpush1.msra.mxu0 %v889
      %1015 = vmatprep.subr.mxu0 %v894
      %1016 = vmatpush1.msra.mxu0 %v893
      %1017 = vmatprep.subr.mxu0 %v898
      %1018 = vmatpush1.msra.mxu0 %v897
      %1019 = vmatprep.subr.mxu0 %v902
      %1020 = vmatpush1.msra.mxu0 %v901
      %1021 = vmatprep.subr.mxu0 %v906
      %1022 = vmatpush1.msra.mxu0 %v905
      %1023 = vmatprep.subr.mxu0 %v910
      %1024 = vmatpush1.msra.mxu0 %v909
      %1025 = vmatprep.subr.mxu0 %v914
      %1026 = vmatpush1.msra.mxu0 %v913
      %1027 = vmatprep.subr.mxu0 %v918
      %1028 = vmatpush1.msra.mxu0 %v917
      %1029 = vmatprep.subr.mxu0 %v922
      %1030 = vmatpush1.msra.mxu0 %v921
      %1031 = vmatprep.subr.mxu0 %v926
      %1032 = vmatpush1.msra.mxu0 %v925
      %1033 = vmatprep.subr.mxu0 %v930
      %1034 = vmatpush1.msra.mxu0 %v929
      %1035 = vmatprep.subr.mxu0 0.0
      %1036 = vmatpush1.msra.mxu0 0.0
      %1037 = vmatprep.subr.mxu0 0.0
      %1038 = vmatpush1.msra.mxu0 0.0
      %1039 = vmatprep.subr.mxu0 0.0
      %1040 = vmatpush1.msra.mxu0 0.0
      %1041 = vmatprep.subr.mxu0 0.0
      %1042 = vmatpush1.msra.mxu0 0.0
      %1043 = vmatprep.subr.mxu0 0.0
      %1044 = vmatpush1.msra.mxu0 0.0
      %1045 = vmatprep.subr.mxu0 0.0
      %1046 = vmatpush1.msra.mxu0 0.0
      %1047 = vmatprep.subr.mxu0 0.0
      %1048 = vmatpush1.msra.mxu0 0.0
      %1049 = vmatprep.subr.mxu0 0.0
      %1050 = vmatpush1.msra.mxu0 0.0
      %1051 = vmatprep.subr.mxu0 0.0
      %1052 = vmatpush1.msra.mxu0 0.0
      %1053 = vmatprep.subr.mxu0 0.0
      %1054 = vmatpush1.msra.mxu0 0.0
      %1055 = vmatprep.subr.mxu0 0.0
      %1056 = vmatpush1.msra.mxu0 0.0
      %1057 = vmatprep.subr.mxu0 0.0
      %1058 = vmatpush1.msra.mxu0 0.0
      %1059 = vmatprep.subr.mxu0 0.0
      %1060 = vmatpush1.msra.mxu0 0.0
      %1061 = vmatprep.subr.mxu0 0.0
      %1062 = vmatpush1.msra.mxu0 0.0
      %1063 = vmatprep.subr.mxu0 0.0
      %1064 = vmatpush1.msra.mxu0 0.0
      %1065 = vmatprep.subr.mxu0 0.0
      %1066 = vmatpush1.msra.mxu0 0.0
      %1067 = vmatprep.mubr.f32.mxu0 0.0
      %1068 = vmatmul.mubr.f32.gmra.mrb[0].mxu0 %v931
      %v1069 = vpop.f32.mrb[0].mxu0
      %v1070 = vadd.f32 0.0, %v1069
      %v1071 = vpop.f32.mrb[0].mxu0
      %v1072 = vadd.f32 0.0, %v1071
      %1073 = vdwg.mxu0
      %v1074 = vxor.u32 %v999, 2147483648
      %v1075 = vxor.u32 %v1001, 2147483648
      %v1076 = vxor.u32 %v1070, 2147483648
      %v1077 = vxor.u32 %v1072, 2147483648
      %v1078 = vmul.f32 %v1074, 1.442695
      %v1079 = vpow.pop %v1078
      %v1080 = vmul.f32 %v1075, 1.442695
      %v1081 = vpow.pop %v1080
      %v1082 = vmul.f32 %v1076, 1.442695
      %v1083 = vpow.pop %v1082
      %v1084 = vmul.f32 %v1077, 1.442695
      %v1085 = vpow.pop %v1084
      %v1086 = vadd.f32 %v1079, 1.0
      %v1087 = vadd.f32 %v1081, 1.0
      %v1088 = vadd.f32 %v1083, 1.0
      %v1089 = vadd.f32 %v1085, 1.0
      %v1090 = vrcp.pop %v1086
      %v1091 = vmul.f32 1.0, %v1090
      %v1092 = vrcp.pop %v1087
      %v1093 = vmul.f32 1.0, %v1092
      %v1094 = vrcp.pop %v1088
      %v1095 = vmul.f32 1.0, %v1094
      %v1096 = vrcp.pop %v1089
      %v1097 = vmul.f32 1.0, %v1096
      %v1102 = vcombine.low %v1091, %v1093
      %v1103 = vcombine.low %v1095, %v1097
      %v1105 = vunpack.c.l.s4 1966171168
      %v1106 = vunpack.c.0.s8 %v1105
      %v1107 = vlaneseq
      %v1108 = vshrl.u32 %v1107, 7
      %v1109 = vsub.s32 %v1106, %v1108
      %v1110 = vrot.slane %v1102, %v1109
      %v1112 = vunpack.c.l.s4 1966171168
      %v1113 = vunpack.c.0.s8 %v1112
      %v1114 = vlaneseq
      %v1115 = vshrl.u32 %v1114, 7
      %v1116 = vsub.s32 %v1113, %v1115
      %v1117 = vrot.slane %v1103, %v1116
      %v1118 = vcombine.low %v1110, %v1117
      %v1120 = vunpack.c.l.s4 1966171168
      %v1121 = vunpack.c.0.s8 %v1120
      %v1122 = vlaneseq
      %v1123 = vshrl.u32 %v1122, 7
      %v1124 = vsub.s32 %v1121, %v1123
      %v1125 = vrot.slane %v1118, %v1124
      %v1127 = vlaneseq
      %vm1128 = vcmp.ge.s32.totalorder %v1127, 0
      %vm1129 = vcmp.lt.s32.totalorder %v1127, 512
      %vm1130 = vmand %vm1128, %vm1129
      %1131 = vst.msk [vmem:[%s220] sm:$0xf] %vm1130, %v1125
      %s1132 = smul.u32 4, %s15
      %p1133 = scmp.lt.s32.totalorder %s1132, 7
      %s1134 = scalar_select %p1133, %s1132, 7
      %s1135 = scalar_lea.vmem %s4, %s1134
      // Predicated region
      $region37: #{grid_prediction_forward.1} parent=35 // pred_check
        %p1136 = pneg %p129
      $region38: #{grid_prediction_forward.1} parent=35 // pred_check_branch
        %1138 = sbr.rel (%p1136) target = $region40
      $region39: #{grid_prediction_forward.1} parent=35 // pred_region
        %s1139 = smul.u32 4, %s15
      $region40: #{grid_prediction_forward.1} parent=35 // pred_fallthru
        _
    $region36: #{grid_prediction_forward.1} parent=5 // pred_fallthru
      _
    %p1140 = scmp.le.s32.totalorder 2, %s10
    // Predicated region
    $region41: #{grid_prediction_forward.1} parent=5 // pred_check
      %p1141 = pneg %p1140
    $region42: #{grid_prediction_forward.1} parent=5 // pred_check_branch
      %1143 = sbr.rel (%p1141) target = $region44
    $region43: #{grid_prediction_forward.1} parent=5 // pred_region
      %s1144 = ssub.s32 %s10, 2
      // Predicated region
      $region45: #{grid_prediction_forward.1} parent=43 // pred_check
        %p1145 = pneg %p135
      $region46: #{grid_prediction_forward.1} parent=43 // pred_check_branch
        %1147 = sbr.rel (%p1145) target = $region48
      $region47: #{grid_prediction_forward.1} parent=43 // pred_region
        %s1148 = smul.u32 4, %s16
        %p1149 = scmp.lt.s32.totalorder %s1148, 7
        %s1150 = scalar_select %p1149, %s1148, 7
        %s1151 = scalar_lea.vmem %s4, %s1150
      $region48: #{grid_prediction_forward.1} parent=43 // pred_fallthru
        _
    $region44: #{grid_prediction_forward.1} parent=5 // pred_fallthru
      _
  $region6: #{grid_prediction_forward.1} parent=0 // loop_footer
    %s14 = sadd.s32 1, %s10
  $region7: #{grid_prediction_forward.1} parent=0 // loop_footer_branch
    %9 = sbr.rel target = $region3
  $region8: #{grid_prediction_forward.1} parent=0 // loop_exit
    _

</llo_original>
